<compile_context>
chip_gen: v7x
topology: tpu7x:2x2x1
jax: 0.10.0
libtpu: 0.0.40
codegen_flags: <defaults>
</compile_context>

<pallas_src>
import math
import jax
import jax.numpy as jnp
from jax.experimental import pallas as pl
from jax.experimental.pallas import tpu as pltpu


def _detect_vmem_limit():
    """Per-generation scoped-VMEM limit: ~3/4 of physical, capped at 96 MiB."""
    cap = None
    try:
        info = pltpu.get_tpu_info()
        cap = getattr(info, "vmem_capacity_bytes", None)
    except Exception:
        cap = None
    if not cap:
        cap = 64 * 1024 * 1024            # conservative fallback (v7x physical)
    return int(min(cap * 3 // 4, 96 * 1024 * 1024))


_VMEM_LIMIT = _detect_vmem_limit()


def _pick_tile(dim, pref, min_tile):
    """Largest tile <= pref (halving from pref) that divides dim, else the full dim."""
    if dim <= pref:
        return dim
    t = pref
    while t >= min_tile:
        if dim % t == 0:
            return t
        t //= 2
    return dim


# --------------------------- tiled linear: x @ W + b -------------------------

def _linear_kernel_single(x_ref, w_ref, b_ref, o_ref):
    # Whole contraction in one shot: no k-loop, no accumulator scratch.
    o_ref[...] = (jnp.dot(x_ref[...], w_ref[...],
                          preferred_element_type=jnp.float32)
                  + b_ref[...].astype(jnp.float32)).astype(o_ref.dtype)


def _linear_kernel_acc(x_ref, w_ref, b_ref, o_ref, acc_ref):
    kk = pl.program_id(2)

    @pl.when(kk == 0)
    def _():
        acc_ref[...] = jnp.zeros_like(acc_ref)

    acc_ref[...] += jnp.dot(x_ref[...], w_ref[...],
                            preferred_element_type=jnp.float32)

    @pl.when(kk == pl.num_programs(2) - 1)
    def _():
        o_ref[...] = (acc_ref[...] + b_ref[...].astype(jnp.float32)).astype(o_ref.dtype)


def pallas_linear(x2d, w, b):
    """x2d: (M, K), w: (K, N) (already (in, out)), b: (N,) -> (M, N)."""
    M, K = x2d.shape
    N = w.shape[1]
    itemsize = jnp.dtype(x2d.dtype).itemsize
    budget = _VMEM_LIMIT // 2

    tm = _pick_tile(M, 512, 8)        # sublane-aligned rows
    tn = _pick_tile(N, 512, 128)      # lane-dense output columns

    def fits(tm_, tn_, tk_):
        # double-buffered x/w/bias/out blocks (+ f32 acc scratch when tk_ < K)
        blocks = 2 * itemsize * (tm_ * tk_ + tk_ * tn_ + tn_ + tm_ * tn_)
        acc = 0 if tk_ == K else 4 * tm_ * tn_
        return blocks + acc <= budget

    if fits(tm, tn, K):
        tk = K                        # single-shot path (preferred)
    else:
        tk = _pick_tile(K, 512, 128)
        while not fits(tm, tn, tk):
            if tk >= 256 and K % (tk // 2) == 0:
                tk //= 2
            elif tm >= 16 and M % (tm // 2) == 0:
                tm //= 2
            elif tn >= 256 and N % (tn // 2) == 0:
                tn //= 2
            else:
                break

    b2d = b.reshape(1, N)

    if tk == K:
        return pl.pallas_call(
            _linear_kernel_single,
            out_shape=jax.ShapeDtypeStruct((M, N), x2d.dtype),
            grid=(M // tm, N // tn),
            in_specs=[
                pl.BlockSpec((tm, K), lambda i, j: (i, 0)),
                pl.BlockSpec((K, tn), lambda i, j: (0, j)),
                pl.BlockSpec((1, tn), lambda i, j: (0, j)),
            ],
            out_specs=pl.BlockSpec((tm, tn), lambda i, j: (i, j)),
            compiler_params=pltpu.CompilerParams(
                dimension_semantics=("parallel", "parallel"),
                vmem_limit_bytes=_VMEM_LIMIT),
        )(x2d, w, b2d)

    return pl.pallas_call(
        _linear_kernel_acc,
        out_shape=jax.ShapeDtypeStruct((M, N), x2d.dtype),
        grid=(M // tm, N // tn, K // tk),
        in_specs=[
            pl.BlockSpec((tm, tk), lambda i, j, kk: (i, kk)),
            pl.BlockSpec((tk, tn), lambda i, j, kk: (kk, j)),
            pl.BlockSpec((1, tn), lambda i, j, kk: (0, j)),
        ],
        out_specs=pl.BlockSpec((tm, tn), lambda i, j, kk: (i, j)),
        scratch_shapes=[pltpu.VMEM((tm, tn), jnp.float32)],
        compiler_params=pltpu.CompilerParams(
            dimension_semantics=("parallel", "parallel", "arbitrary"),
            vmem_limit_bytes=_VMEM_LIMIT),
    )(x2d, w, b2d)


# ------------------------- flash attention (online softmax) ------------------

def _flash_attn_kernel(q_ref, k_ref, v_ref, o_ref, m_sc, l_sc, acc_sc, q_sc):
    # q_ref: (TQ, Hc, D)   k_ref/v_ref: (TK, Hc, D)   o_ref: (TQ, Hc*D)
    # m_sc/l_sc: (Hc, TQ, 1) f32   acc_sc: (Hc, TQ, D) f32   q_sc: (Hc, TQ, D)
    ki = pl.program_id(3)
    num_k = pl.num_programs(3)
    Hc, _, D = acc_sc.shape

    @pl.when(ki == 0)
    def _():
        m_sc[...] = jnp.full(m_sc.shape, -jnp.inf, jnp.float32)
        l_sc[...] = jnp.zeros(l_sc.shape, jnp.float32)
        acc_sc[...] = jnp.zeros(acc_sc.shape, jnp.float32)
        # q block is invariant along ki: bring it to heads-major layout once
        # per (batch, head-group, q-tile).  The 1/sqrt(D) scale is already
        # folded into the Wqkv q-columns, so no per-step rescale is needed.
        for h in range(Hc):
            q_sc[h] = q_ref[:, h, :]

    qk_dims = (((1,), (1,)), ((), ()))          # 'qd,kd->qk' (no k transpose)
    for h in range(Hc):                          # unrolled per-head flash step
        k_h = k_ref[:, h, :]                     # (TK, D)
        v_h = v_ref[:, h, :]                     # (TK, D)

        s_h = jax.lax.dot_general(q_sc[h], k_h, qk_dims,
                                  preferred_element_type=jnp.float32)   # (TQ, TK)

        m_prev = m_sc[h]                                                # (TQ, 1)
        m_new = jnp.maximum(m_prev, jnp.max(s_h, axis=-1, keepdims=True))
        alpha = jnp.exp(m_prev - m_new)                                 # (TQ, 1)
        p = jnp.exp(s_h - m_new)                                        # (TQ, TK) lane-broadcast

        l_sc[h] = alpha * l_sc[h] + jnp.sum(p, axis=-1, keepdims=True)
        acc_sc[h] = alpha * acc_sc[h] + jnp.dot(
            p.astype(v_h.dtype), v_h, preferred_element_type=jnp.float32)
        m_sc[h] = m_new

    @pl.when(ki == num_k - 1)
    def _():
        # Lane-dense (TQ, Hc*D) output slab: heads are written into static
        # column slices of the VMEM out block; the HBM store stays unmasked.
        for h in range(Hc):
            inv_l = pl.reciprocal(l_sc[h], approx=False)   # exact: epilogue-only cost
            o_ref[:, h * D:(h + 1) * D] = (acc_sc[h] * inv_l).astype(o_ref.dtype)


def _head_chunk_candidates(H, D):
    # Hc must be == H, or a multiple of 8 (sublane rule for the (Hc, D) block
    # tail) whose Hc*D output slab stays a multiple of 128 lanes.
    cands = {H}
    for hc in range(8, H, 8):
        if H % hc == 0 and (hc * D) % 128 == 0:
            cands.add(hc)
    return sorted(cands, reverse=True)


def _attn_tiles(S, H, D, itemsize, budget):
    TQ = _pick_tile(S, 512, 128)
    TK = _pick_tile(S, 512, 128)
    cands = _head_chunk_candidates(H, D)

    def est(hc, tq, tk):
        blocks = 2 * itemsize * (2 * tq * hc * D + 2 * tk * hc * D)      # q/out + k/v, double buffered
        scratch = 4 * (2 * hc * tq + hc * tq * D) + itemsize * hc * tq * D
        temps = 3 * 4 * hc * tq * tk                                     # s/p temporaries (+ headroom)
        return blocks + scratch + temps

    while True:
        for hc in cands:                      # prefer the largest head chunk that fits
            if est(hc, TQ, TK) <= budget:
                return hc, TQ, TK
        if TK > 128 and S % (TK // 2) == 0:
            TK //= 2
        elif TQ > 128 and S % (TQ // 2) == 0:
            TQ //= 2
        else:
            return cands[-1], TQ, TK


def pallas_flash_attention(qkv):
    """qkv: (B, S, 3, H, D) -> context already in (B, S, H*D) layout."""
    B, S, three, H, D = qkv.shape
    assert three == 3
    E = H * D
    budget = _VMEM_LIMIT // 2
    Hc, TQ, TK = _attn_tiles(S, H, D, jnp.dtype(qkv.dtype).itemsize, budget)
    grid = (B, H // Hc, S // TQ, S // TK)

    q_spec = pl.BlockSpec((None, TQ, None, Hc, D),
                          lambda b, hg, qi, ki: (b, qi, 0, hg, 0))
    k_spec = pl.BlockSpec((None, TK, None, Hc, D),
                          lambda b, hg, qi, ki: (b, ki, 1, hg, 0))
    v_spec = pl.BlockSpec((None, TK, None, Hc, D),
                          lambda b, hg, qi, ki: (b, ki, 2, hg, 0))
    o_spec = pl.BlockSpec((None, TQ, Hc * D),
                          lambda b, hg, qi, ki: (b, qi, hg))

    return pl.pallas_call(
        _flash_attn_kernel,
        out_shape=jax.ShapeDtypeStruct((B, S, E), qkv.dtype),
        grid=grid,
        in_specs=[q_spec, k_spec, v_spec],
        out_specs=o_spec,
        scratch_shapes=[
            pltpu.VMEM((Hc, TQ, 1), jnp.float32),   # running max  m
            pltpu.VMEM((Hc, TQ, 1), jnp.float32),   # running sum  l
            pltpu.VMEM((Hc, TQ, D), jnp.float32),   # running unnormalized out
            pltpu.VMEM((Hc, TQ, D), qkv.dtype),     # heads-major q tile
        ],
        compiler_params=pltpu.CompilerParams(
            dimension_semantics=("parallel", "parallel", "parallel", "arbitrary"),
            vmem_limit_bytes=_VMEM_LIMIT),
    )(qkv, qkv, qkv)


# ------------------------------- module wrapper -------------------------------

class FlashMHAPallas:
    """JAX/Pallas re-implementation of FlashMHA.forward (eval, non-causal, dropout=0)."""

    def __init__(self, embed_dim, num_heads, key, dtype=jnp.float32):
        assert embed_dim % num_heads == 0
        self.embed_dim = embed_dim
        self.num_heads = num_heads
        self.head_dim = embed_dim // num_heads
        assert self.head_dim % 8 == 0 and self.head_dim <= 128

        k1, k2, k3, k4 = jax.random.split(key, 4)
        bound = 1.0 / math.sqrt(embed_dim)
        # Weights stored already transposed to (in, out) for x @ W layout.
        self.wqkv = jax.random.uniform(k1, (embed_dim, 3 * embed_dim), dtype, -bound, bound)
        self.bqkv = jax.random.uniform(k2, (3 * embed_dim,), dtype, -bound, bound)
        self.wout = jax.random.uniform(k3, (embed_dim, embed_dim), dtype, -bound, bound)
        self.bout = jax.random.uniform(k4, (embed_dim,), dtype, -bound, bound)

        # Fold the attention 1/sqrt(head_dim) scale into the q-slice of the
        # QKV projection (the first E columns in the '(3 h d)' column order),
        # so the flash kernel never multiplies the q tile per KV step.
        scale = self.head_dim ** -0.5
        col_scale = jnp.concatenate(
            [jnp.full((embed_dim,), scale, dtype), jnp.ones((2 * embed_dim,), dtype)])
        self._wqkv_scaled = self.wqkv * col_scale[None, :]
        self._bqkv_scaled = self.bqkv * col_scale

    def __call__(self, query, key=None, value=None, need_weights=False):
        # The PyTorch module derives q, k, v from `query` alone through Wqkv.
        B, S, E = query.shape
        H, D = self.num_heads, self.head_dim

        # QKV projection (tiled Pallas matmul, scale pre-folded into weights).
        qkv = pallas_linear(query.reshape(B * S, E), self._wqkv_scaled, self._bqkv_scaled)
        # Free (metadata-only) view; the attention BlockSpecs pick q/k/v off
        # the '3' axis directly, so there is no 'b s (3 h d) -> 3 b h s d'
        # HBM transpose between the two Pallas calls anymore.
        qkv = qkv.reshape(B, S, 3, H, D)

        # Flash attention; writes context directly in 'b s (h d)' layout.
        context = pallas_flash_attention(qkv)                               # (B, S, E)

        # Output projection (tiled Pallas matmul); reshape is free.
        out = pallas_linear(context.reshape(B * S, E), self.wout, self.bout)
        # TODO(synk): causal masking, attn_mask / attn_bias and train-time dropout
        # are not implemented (module defaults: causal=False, dropout=0.0, eval).
        # TODO(synk): optional bf16 operand cast for v6e/v7x MXU rates (kept f32 here
        # to match the f32 reference numerics exactly).
        return out.reshape(B, S, E), None


# --------------------------------- reference ----------------------------------

def _reference_forward(mha, x):
    B, S, E = x.shape
    H, D = mha.num_heads, mha.head_dim
    qkv = x.reshape(B * S, E) @ mha.wqkv + mha.bqkv
    qkv = qkv.reshape(B, S, 3, H, D).transpose(2, 0, 3, 1, 4)
    q, k, v = qkv[0], qkv[1], qkv[2]
    s = jnp.einsum("bhid,bhjd->bhij", q, k) * (D ** -0.5)
    p = jax.nn.softmax(s, axis=-1)
    ctx = jnp.einsum("bhij,bhjd->bhid", p, v)
    ctx = ctx.transpose(0, 2, 1, 3).reshape(B * S, E)
    return (ctx @ mha.wout + mha.bout).reshape(B, S, E)


# ----------------------------------- main --------------------------------------

if __name__ == "__main__":
    key = jax.random.PRNGKey(0)
    k_param, k_x, k_param2, k_x2 = jax.random.split(key, 4)

    # Small smoke test (batch=2, seq=8, hidden=32, heads=4 -> head_dim=8).
    B, S, E, H = 2, 8, 32, 4
    mha = FlashMHAPallas(embed_dim=E, num_heads=H, key=k_param)
    x = jax.random.normal(k_x, (B, S, E), jnp.float32)
    out, attn = mha(x, x, x, need_weights=False)
    out = jax.block_until_ready(out)
    ref = _reference_forward(mha, x)
    assert out.shape == (B, S, E) and attn is None
    assert jnp.allclose(out, ref, atol=5e-3, rtol=5e-3), "small-shape mismatch vs reference"

    # Tiled path: exercises the lane-dense 256/512-wide linear tiles and the
    # multi-tile online softmax (grid has 2 q-tiles x 2 kv-tiles at TQ=TK=512).
    B2, S2, E2, H2 = 1, 1024, 256, 4            # head_dim = 64
    mha2 = FlashMHAPallas(embed_dim=E2, num_heads=H2, key=k_param2)
    x2 = jax.random.normal(k_x2, (B2, S2, E2), jnp.float32)
    out2, _ = mha2(x2, x2, x2)
    out2 = jax.block_until_ready(out2)
    ref2 = _reference_forward(mha2, x2)
    assert jnp.allclose(out2, ref2, atol=5e-3, rtol=5e-3), "tiled-shape mismatch vs reference"

    print("KERNEL_OK")
</pallas_src>

<mosaic_0001>
module attributes {stable_mosaic.version = 11 : i64} {
  func.func @_linear_kernel_single(%arg0: i32, %arg1: i32, %arg2: memref<16x32xf32, #tpu.memory_space<vmem>>, %arg3: memref<32x96xf32, #tpu.memory_space<vmem>>, %arg4: memref<1x96xf32, #tpu.memory_space<vmem>>, %arg5: memref<16x96xf32, #tpu.memory_space<vmem>>) attributes {dimension_semantics = [#tpu.dimension_semantics<parallel>, #tpu.dimension_semantics<parallel>], iteration_bounds = array<i64: 1, 1>, scalar_prefetch = 0 : i64, scratch_operands = 0 : i64, tpu.core_type = #tpu.core_type<tc>, window_params = [{transform_indices = @transform_0, window_bounds = array<i64: 16, 32>}, {transform_indices = @transform_1, window_bounds = array<i64: 32, 96>}, {transform_indices = @transform_2, window_bounds = array<i64: 1, 96>}, {transform_indices = @transform_3, window_bounds = array<i64: 16, 96>}]} {
    %c0 = arith.constant 0 : index
    %c0_0 = arith.constant 0 : index
    %0 = vector.load %arg2[%c0, %c0_0] : memref<16x32xf32, #tpu.memory_space<vmem>>, vector<16x32xf32>
    %c0_1 = arith.constant 0 : index
    %c0_2 = arith.constant 0 : index
    %1 = vector.load %arg3[%c0_1, %c0_2] : memref<32x96xf32, #tpu.memory_space<vmem>>, vector<32x96xf32>
    %cst = arith.constant dense<0.000000e+00> : vector<16x96xf32>
    %2 = tpu.matmul %0, %1, %cst {dimension_numbers = #tpu.dot_dimension_numbers<[1], [0], [0], [1], [0, 0, 1, 1], [], []>} : vector<16x32xf32>, vector<32x96xf32>, vector<16x96xf32> -> vector<16x96xf32>
    %c0_3 = arith.constant 0 : index
    %c0_4 = arith.constant 0 : index
    %3 = vector.load %arg4[%c0_3, %c0_4] : memref<1x96xf32, #tpu.memory_space<vmem>>, vector<1x96xf32>
    %4 = vector.broadcast %3 : vector<1x96xf32> to vector<16x96xf32>
    %5 = arith.addf %2, %4 : vector<16x96xf32>
    %c0_5 = arith.constant 0 : index
    %c0_6 = arith.constant 0 : index
    %6 = vector.load %arg5[%c0_5, %c0_6] : memref<16x96xf32, #tpu.memory_space<vmem>>, vector<16x96xf32>
    tpu.vector_store %arg5[%c0_5, %c0_6], %5 {strides = array<i32>} : memref<16x96xf32, #tpu.memory_space<vmem>>, vector<16x96xf32>,
    return
  }
  func.func @transform_0(%arg0: i32, %arg1: i32) -> (i32, i32) {
    %c0_i32 = arith.constant 0 : i32
    %c0_i32_0 = arith.constant 0 : i32
    return %arg0, %c0_i32 : i32, i32
  }
  func.func @transform_1(%arg0: i32, %arg1: i32) -> (i32, i32) {
    %c0_i32 = arith.constant 0 : i32
    %c0_i32_0 = arith.constant 0 : i32
    return %c0_i32, %arg1 : i32, i32
  }
  func.func @transform_2(%arg0: i32, %arg1: i32) -> (i32, i32) {
    %c0_i32 = arith.constant 0 : i32
    %c0_i32_0 = arith.constant 0 : i32
    return %c0_i32, %arg1 : i32, i32
  }
  func.func @transform_3(%arg0: i32, %arg1: i32) -> (i32, i32) {
    %c0_i32 = arith.constant 0 : i32
    return %arg0, %arg1 : i32, i32
  }
}

</mosaic_0001>

<llo_original>
// kernel: tpu_custom_call.1
$region0: #{tpu_custom_call.1}
  #allocation0 [shape = 'u32[]', space=smem, size = 0x4, offset = 0x4, fixed_abs, tag = 'smem constant byte address 0x4 - core index']
  #allocation1 [shape = 'u32[144,128]{1,0:T(1,128)}', space=vmem, size = 0x12000, scoped, tag = 'internal scratch']
  %s0 = inlined_call_operand.hbm [shape: f32[16,32], index: 0, kind: input, shape index: {}]
  %s1 = inlined_call_operand.hbm [shape: f32[32,96], index: 1, kind: input, shape index: {}]
  %s2 = inlined_call_operand.vmem [shape: f32[1,96], index: 2, kind: input, shape index: {}]
  %s3 = inlined_call_operand.hbm [shape: f32[16,96], index: 3, kind: output, shape index: {}]
  %s4 = sld [smem:[#allocation0]]
  $region30: #{tpu_custom_call.1} parent=0
    _
  %s6 = ssub.s32 1, %s4
  %s7 = scalar_select 0, %s6, %s4
  $region1: #{tpu_custom_call.1} parent=0
    #allocation2 [shape = 'u8[8192]{0}', space=vmem, size = 0x2000, scoped, tag = 'input window, operand 0, single buffered']
    #allocation3 [shape = 's32[1]{0}', space=sflag, size = 0x4, scoped, tag = 'scoped memory for tpu_custom_call.1']
    #allocation4 [shape = 's32[1]{0}', space=sflag, size = 0x4, scoped, tag = 'scoped memory for tpu_custom_call.1']
    #allocation5 [shape = 'u8[16384]{0}', space=vmem, size = 0x4000, scoped, tag = 'input window, operand 1, single buffered']
    #allocation6 [shape = 's32[1]{0}', space=sflag, size = 0x4, scoped, tag = 'scoped memory for tpu_custom_call.1']
    #allocation7 [shape = 'u8[8192]{0}', space=vmem, size = 0x2000, scoped, tag = 'output window, operand 0, single buffered']
    %8 = vsyncpa [#allocation3], 0
    %9 = vsyncpa [#allocation6], 0
    %10 = vsyncpa [#allocation4], 0
    // Predicated region
    $region2: #{tpu_custom_call.1} parent=1 // pred_check
      _
    $region3: #{tpu_custom_call.1} parent=1 // pred_check_branch
      %12 = sbr.rel (0) target = $region5
    $region4: #{tpu_custom_call.1} parent=1 // pred_region
      %s14 = ssub.s32 256, 256
      %15 = vsyncadd [#allocation3], %s14
      %s16 = sshll.u32 [#allocation2], 4
      %s17 = int_to_ptr.vmem [resolvable:$true] %s16
      %22 = dma.hbm_to_vmem [thread:$0]  %s0, 256, %s17, [#allocation3], 128, 128, 8
    $region5: #{tpu_custom_call.1} parent=1 // pred_fallthru
      _
    // Predicated region
    $region6: #{tpu_custom_call.1} parent=1 // pred_check
      _
    $region7: #{tpu_custom_call.1} parent=1 // pred_check_branch
      %24 = sbr.rel (0) target = $region9
    $region8: #{tpu_custom_call.1} parent=1 // pred_region
      %s26 = ssub.s32 512, 512
      %27 = vsyncadd [#allocation6], %s26
      %s28 = sshll.u32 [#allocation5], 4
      %s29 = int_to_ptr.vmem [resolvable:$true] %s28
      %34 = dma.hbm_to_vmem [thread:$0]  %s1, 512, %s29, [#allocation6], 128, 128, 8
    $region9: #{tpu_custom_call.1} parent=1 // pred_fallthru
      _
    // Predicated region
    $region10: #{tpu_custom_call.1} parent=1 // pred_check
      _
    $region11: #{tpu_custom_call.1} parent=1 // pred_check_branch
      %36 = sbr.rel (0) target = $region13
    $region12: #{tpu_custom_call.1} parent=1 // pred_region
      _
    $region13: #{tpu_custom_call.1} parent=1 // pred_fallthru
      _
    // Predicated region
    $region14: #{tpu_custom_call.1} parent=1 // pred_check
      _
    $region15: #{tpu_custom_call.1} parent=1 // pred_check_branch
      %38 = sbr.rel (0) target = $region17
    $region16: #{tpu_custom_call.1} parent=1 // pred_region
      %39 = dma.done [#allocation3], 256
    $region17: #{tpu_custom_call.1} parent=1 // pred_fallthru
      _
    // Predicated region
    $region18: #{tpu_custom_call.1} parent=1 // pred_check
      _
    $region19: #{tpu_custom_call.1} parent=1 // pred_check_branch
      %41 = sbr.rel (0) target = $region21
    $region20: #{tpu_custom_call.1} parent=1 // pred_region
      %42 = dma.done [#allocation6], 512
    $region21: #{tpu_custom_call.1} parent=1 // pred_fallthru
      _
    %v43 = vld [vmem:[#allocation2] sm:$0xff]
    %v44 = vld [vmem:[#allocation2 + $0x8] sm:$0xff]
    %v45 = vld [vmem:[#allocation5] sm:$0xff]
    %v46 = vld [vmem:[#allocation5 + $0x8] sm:$0xff]
    %v47 = vld [vmem:[#allocation5 + $0x10] sm:$0xff]
    %v48 = vld [vmem:[#allocation5 + $0x18] sm:$0xff]
    %v49 = vld [vmem:[%s2] sm:$0x1]
    %v51 = vlaneseq
    %v52 = vshrl.u32 %v51, 7
    %v53 = vsub.s32 0, %v52
    %v54 = vrot.slane %v49, %v53
    %vm56 = vcmask 261120
    %v58 = vsel %vm56, %v43, 0
    %v61 = vsel %vm56, %v44, 0
    %63 = vmatprep.subr.mxu0 0.0
    %64 = vmatpush1.msra.mxu0 %v45
    %65 = vmatprep.subr.mxu0 0.0
    %66 = vmatpush1.msra.mxu0 %v46
    %67 = vmatprep.subr.mxu0 0.0
    %68 = vmatpush1.msra.mxu0 %v47
    %69 = vmatprep.subr.mxu0 0.0
    %70 = vmatpush1.msra.mxu0 %v48
    %71 = vmatprep.subr.mxu0 0.0
    %72 = vmatpush1.msra.mxu0 0.0
    %73 = vmatprep.subr.mxu0 0.0
    %74 = vmatpush1.msra.mxu0 0.0
    %75 = vmatprep.subr.mxu0 0.0
    %76 = vmatpush1.msra.mxu0 0.0
    %77 = vmatprep.subr.mxu0 0.0
    %78 = vmatpush1.msra.mxu0 0.0
    %79 = vmatprep.subr.mxu0 0.0
    %80 = vmatpush1.msra.mxu0 0.0
    %81 = vmatprep.subr.mxu0 0.0
    %82 = vmatpush1.msra.mxu0 0.0
    %83 = vmatprep.subr.mxu0 0.0
    %84 = vmatpush1.msra.mxu0 0.0
    %85 = vmatprep.subr.mxu0 0.0
    %86 = vmatpush1.msra.mxu0 0.0
    %87 = vmatprep.subr.mxu0 0.0
    %88 = vmatpush1.msra.mxu0 0.0
    %89 = vmatprep.subr.mxu0 0.0
    %90 = vmatpush1.msra.mxu0 0.0
    %91 = vmatprep.subr.mxu0 0.0
    %92 = vmatpush1.msra.mxu0 0.0
    %93 = vmatprep.subr.mxu0 0.0
    %94 = vmatpush1.msra.mxu0 0.0
    %95 = vmatprep.subr.mxu0 0.0
    %96 = vmatpush1.msra.mxu0 0.0
    %97 = vmatprep.subr.mxu0 0.0
    %98 = vmatpush1.msra.mxu0 0.0
    %99 = vmatprep.subr.mxu0 0.0
    %100 = vmatpush1.msra.mxu0 0.0
    %101 = vmatprep.subr.mxu0 0.0
    %102 = vmatpush1.msra.mxu0 0.0
    %103 = vmatprep.subr.mxu0 0.0
    %104 = vmatpush1.msra.mxu0 0.0
    %105 = vmatprep.subr.mxu0 0.0
    %106 = vmatpush1.msra.mxu0 0.0
    %107 = vmatprep.subr.mxu0 0.0
    %108 = vmatpush1.msra.mxu0 0.0
    %109 = vmatprep.subr.mxu0 0.0
    %110 = vmatpush1.msra.mxu0 0.0
    %111 = vmatprep.subr.mxu0 0.0
    %112 = vmatpush1.msra.mxu0 0.0
    %113 = vmatprep.subr.mxu0 0.0
    %114 = vmatpush1.msra.mxu0 0.0
    %115 = vmatprep.subr.mxu0 0.0
    %116 = vmatpush1.msra.mxu0 0.0
    %117 = vmatprep.subr.mxu0 0.0
    %118 = vmatpush1.msra.mxu0 0.0
    %119 = vmatprep.subr.mxu0 0.0
    %120 = vmatpush1.msra.mxu0 0.0
    %121 = vmatprep.subr.mxu0 0.0
    %122 = vmatpush1.msra.mxu0 0.0
    %123 = vmatprep.subr.mxu0 0.0
    %124 = vmatpush1.msra.mxu0 0.0
    %125 = vmatprep.subr.mxu0 0.0
    %126 = vmatpush1.msra.mxu0 0.0
    %127 = vmatprep.mubr.f32.mxu0 0.0
    %128 = vmatmul.mubr.f32.gmra.mrb[0].mxu0 %v58
    %v129 = vpop.f32.mrb[0].mxu0
    %v130 = vadd.f32 %v54, %v129
    %v131 = vpop.f32.mrb[0].mxu0
    %132 = vmatprep.mubr.f32.mxu0 0.0
    %133 = vmatmul.mubr.f32.gmra.mrb[0].mxu0 %v61
    %v134 = vpop.f32.mrb[0].mxu0
    %v135 = vadd.f32 %v54, %v134
    %v136 = vpop.f32.mrb[0].mxu0
    %137 = vdwg.mxu0
    %vm138 = vcmask 785408
    %139 = vst.msk [vmem:[#allocation7] sm:$0xff] %vm138, %v130
    %140 = vst.msk [vmem:[#allocation7 + $0x8] sm:$0xff] %vm138, %v135
    // Predicated region
    $region22: #{tpu_custom_call.1} parent=1 // pred_check
      _
    $region23: #{tpu_custom_call.1} parent=1 // pred_check_branch
      %142 = sbr.rel (0) target = $region25
    $region24: #{tpu_custom_call.1} parent=1 // pred_region
      %s144 = ssub.s32 256, 256
      %145 = vsyncadd [#allocation4], %s144
      %s146 = sshll.u32 [#allocation7], 4
      %s147 = int_to_ptr.vmem [resolvable:$true] %s146
      %152 = dma.vmem_to_hbm [thread:$0]  %s147, 256, %s3, [#allocation4], 128, 128, 8
    $region25: #{tpu_custom_call.1} parent=1 // pred_fallthru
      _
    // Predicated region
    $region26: #{tpu_custom_call.1} parent=1 // pred_check
      _
    $region27: #{tpu_custom_call.1} parent=1 // pred_check_branch
      %154 = sbr.rel (0) target = $region29
    $region28: #{tpu_custom_call.1} parent=1 // pred_region
      %155 = dma.done [#allocation4], 256
    $region29: #{tpu_custom_call.1} parent=1 // pred_fallthru
      _
    %156 = vsyncpa [#allocation3], 1
    %157 = vsyncpa [#allocation6], 1
    %158 = vsyncpa [#allocation4], 1

</llo_original>
